<compile_context>
chip_gen: v7x
topology: tpu7x:2x2x1
jax: 0.10.0
libtpu: 0.0.40
codegen_flags: <defaults>
</compile_context>

<pallas_src>
import math
import jax
import jax.numpy as jnp
from jax.experimental import pallas as pl
from jax.experimental.pallas import tpu as pltpu

HIDDEN = 100
H_PAD = 128     # hidden width padded to one full 128-wide vreg dimension
TM_MAX = 2048   # batch-tile cap (sweep 512-2048); (128, 2048) f32 act = 1 MiB


def _sigmoid(z):
    # sigmoid(z) == 0.5 * tanh(0.5 * z) + 0.5 : one EUP op per element.
    return 0.5 * jnp.tanh(0.5 * z) + 0.5


def mlp_kernel(x_ref, w_ref, cols_ref, o_ref):
    """Whole CustomNet forward for one batch tile, batch kept on the lane axis.

    x_ref:    (1, 1, TM)        f32   lane-dense input slab
    w_ref:    (3, 128, 128)     bf16  hidden weights, PyTorch (out, in) layout
    cols_ref: (128, 8)          f32   columns: w1, b1, b2, b3, b4, w5, b5, pad
    o_ref:    (1, 1, TM)        f32   lane-dense output slab
    """
    x_row = x_ref[...].reshape(1, -1)                     # (1, TM)

    # Layer 1 (in_features == 1): outer-product broadcast MAC on the VPU.
    w1 = cols_ref[:, 0:1]                                 # (128, 1)
    b1 = cols_ref[:, 1:2]                                 # (128, 1)
    h = _sigmoid(w1 * x_row + b1)                         # (128, TM) f32

    # Layers 2-4: lane-dense 128x128 bf16 MXU matmuls, f32 accumulate.
    for l in range(3):
        w = w_ref[l]                                      # (128, 128) bf16
        b = cols_ref[:, l + 2:l + 3]                      # (128, 1)  f32
        z = jnp.dot(w, h.astype(jnp.bfloat16),
                    preferred_element_type=jnp.float32) + b
        h = _sigmoid(z)                                   # (128, TM) f32

    # Layer 5 (out_features == 1): multiply + sublane reduction (VPU/XLU).
    w5 = cols_ref[:, 5:6]                                 # (128, 1)
    b5 = cols_ref[0:1, 6:7]                               # (1, 1)
    z = jnp.sum(h * w5, axis=0, keepdims=True) + b5       # (1, TM)
    o_ref[...] = _sigmoid(z).reshape(1, 1, -1).astype(o_ref.dtype)


def _round_up(v, m):
    return -(-v // m) * m


def _choose_tiling(B):
    """Pick (TM, n_tiles): TM a multiple of 128, capped at TM_MAX, with an even
    number of tiles (>= 2) whenever B > 128 so v7x's two TCs both get work."""
    if B <= 128:
        return 128, 1
    if B <= 256:
        return 128, 2
    n_tiles = 2 * (_round_up(B, 2 * TM_MAX) // (2 * TM_MAX))
    tm = _round_up(-(-B // n_tiles), 128)
    return tm, n_tiles


def custom_net_forward(x, w_hidden, cols):
    """x: (B, 1) float32. w_hidden/cols: packed params from pack_params()."""
    B = x.shape[0]
    TM, n_tiles = _choose_tiling(B)
    B_pad = TM * n_tiles

    x_flat = x.reshape(B)
    if B_pad != B:
        x_flat = jnp.pad(x_flat, (0, B_pad - B))
    x_t = x_flat.reshape(n_tiles, 1, TM)                  # lane-dense input slabs

    out = pl.pallas_call(
        mlp_kernel,
        out_shape=jax.ShapeDtypeStruct((n_tiles, 1, TM), jnp.float32),
        grid=(n_tiles,),
        in_specs=[
            pl.BlockSpec((1, 1, TM), lambda i: (i, 0, 0)),
            # Constant block index -> weights stay VMEM-resident across steps.
            pl.BlockSpec((3, H_PAD, H_PAD), lambda i: (0, 0, 0)),
            pl.BlockSpec((H_PAD, 8), lambda i: (0, 0)),
        ],
        out_specs=pl.BlockSpec((1, 1, TM), lambda i: (i, 0, 0)),
        compiler_params=pltpu.CompilerParams(
            dimension_semantics=("parallel",)),  # shard batch tiles across TCs
    )(x_t, w_hidden, cols)

    return out.reshape(B_pad, 1)[:B]


def init_params(key, input_size=1, hidden=HIDDEN):
    """PyTorch nn.Linear-style init, stored in PyTorch layout W:(out,in), b:(out,)."""
    sizes = [(hidden, input_size), (hidden, hidden), (hidden, hidden),
             (hidden, hidden), (1, hidden)]
    raw = []
    for (fan_out, fan_in) in sizes:
        key, kw, kb = jax.random.split(key, 3)
        bound = 1.0 / math.sqrt(fan_in)
        w = jax.random.uniform(kw, (fan_out, fan_in), jnp.float32, -bound, bound)
        b = jax.random.uniform(kb, (fan_out,), jnp.float32, -bound, bound)
        raw.append((w, b))
    return raw


def pack_params(raw):
    """Pack into two resident arrays.

    w_hidden: (3, 128, 128) bf16, PyTorch (out, in) layout, zero-padded.
    cols:     (128, 8)      f32  columns = [w1, b1, b2, b3, b4, w5, b5, 0].
    Pad columns of each weight / pad biases are zero, so sigmoid(0)=0.5 pad
    activations never contribute -> numerically identical to the 100-wide net.
    """
    (w1, b1), (w2, b2), (w3, b3), (w4, b4), (w5, b5) = raw
    ph = H_PAD - HIDDEN

    def pad_vec(v):                       # (HIDDEN,) -> (H_PAD,)
        return jnp.pad(v, (0, ph))

    w_hidden = jnp.stack([
        jnp.pad(w, ((0, ph), (0, ph))) for w in (w2, w3, w4)
    ]).astype(jnp.bfloat16)               # (3, 128, 128)

    cols = jnp.stack([
        pad_vec(w1[:, 0]),                # input-layer weight column
        pad_vec(b1), pad_vec(b2), pad_vec(b3), pad_vec(b4),
        pad_vec(w5[0, :]),                # output-layer weight as a column
        jnp.full((H_PAD,), b5[0], jnp.float32),   # only [0] is read
        jnp.zeros((H_PAD,), jnp.float32),
    ], axis=1)                            # (128, 8) f32
    return w_hidden, cols


def reference_forward(x, raw):
    """Pure-JAX f32 reference on the unpadded PyTorch-layout params."""
    h = x
    for (w, b) in raw:
        h = jax.nn.sigmoid(h @ w.T + b)
    return h


if __name__ == "__main__":
    key = jax.random.PRNGKey(0)
    key, kx = jax.random.split(key)

    batch = 8
    input_size = 1
    x = jax.random.normal(kx, (batch, input_size), jnp.float32)

    raw_params = init_params(key, input_size=input_size, hidden=HIDDEN)
    w_hidden, cols = pack_params(raw_params)

    out = custom_net_forward(x, w_hidden, cols)
    out = jax.block_until_ready(out)

    ref = reference_forward(x, raw_params)
    assert out.shape == (batch, input_size)
    # bf16 hidden matmuls -> relaxed tolerance vs. the f32 reference.
    max_err = float(jnp.max(jnp.abs(out - ref)))
    assert max_err < 3e-2, max_err

    # TODO(synk): calculate_gradients_param / Integral_function / C_AB /
    # cost_function are autograd + Simpson-quadrature utilities outside the
    # forward pass and are not implemented as Pallas kernels.

    print("KERNEL_OK")
</pallas_src>

<mosaic_0001>
module attributes {stable_mosaic.version = 11 : i64} {
  func.func @mlp_kernel(%arg0: i32, %arg1: memref<1x1x128xf32, #tpu.memory_space<vmem>>, %arg2: memref<3x128x128xbf16, #tpu.memory_space<vmem>>, %arg3: memref<128x8xf32, #tpu.memory_space<vmem>>, %arg4: memref<1x1x128xf32, #tpu.memory_space<vmem>>) attributes {dimension_semantics = [#tpu.dimension_semantics<parallel>], iteration_bounds = array<i64: 1>, scalar_prefetch = 0 : i64, scratch_operands = 0 : i64, tpu.core_type = #tpu.core_type<tc>, window_params = [{transform_indices = @transform_0, window_bounds = array<i64: 1, 1, 128>}, {pipeline_mode = #tpu.pipeline_mode<synchronous>, transform_indices = @transform_1, window_bounds = array<i64: 3, 128, 128>}, {pipeline_mode = #tpu.pipeline_mode<synchronous>, transform_indices = @transform_2, window_bounds = array<i64: 128, 8>}, {transform_indices = @transform_3, window_bounds = array<i64: 1, 1, 128>}]} {
    %c0 = arith.constant 0 : index
    %c0_0 = arith.constant 0 : index
    %c0_1 = arith.constant 0 : index
    %0 = vector.load %arg1[%c0, %c0_0, %c0_1] : memref<1x1x128xf32, #tpu.memory_space<vmem>>, vector<1x1x128xf32>
    %1 = vector.shape_cast %0 : vector<1x1x128xf32> to vector<1x128xf32>
    %c0_2 = arith.constant 0 : index
    %c0_3 = arith.constant 0 : index
    %2 = vector.load %arg3[%c0_2, %c0_3] : memref<128x8xf32, #tpu.memory_space<vmem>>, vector<128x1xf32>
    %c0_4 = arith.constant 0 : index
    %c1 = arith.constant 1 : index
    %3 = vector.load %arg3[%c0_4, %c1] : memref<128x8xf32, #tpu.memory_space<vmem>>, vector<128x1xf32>
    %4 = vector.broadcast %2 : vector<128x1xf32> to vector<128x128xf32>
    %5 = vector.broadcast %1 : vector<1x128xf32> to vector<128x128xf32>
    %6 = arith.mulf %4, %5 : vector<128x128xf32>
    %7 = vector.broadcast %3 : vector<128x1xf32> to vector<128x128xf32>
    %8 = arith.addf %6, %7 : vector<128x128xf32>
    %cst = arith.constant 5.000000e-01 : f32
    %9 = vector.broadcast %cst : f32 to vector<128x128xf32>
    %10 = arith.mulf %9, %8 : vector<128x128xf32>
    %11 = math.tanh %10 : vector<128x128xf32>
    %cst_5 = arith.constant 5.000000e-01 : f32
    %12 = vector.broadcast %cst_5 : f32 to vector<128x128xf32>
    %13 = arith.mulf %12, %11 : vector<128x128xf32>
    %cst_6 = arith.constant 5.000000e-01 : f32
    %14 = vector.broadcast %cst_6 : f32 to vector<128x128xf32>
    %15 = arith.addf %13, %14 : vector<128x128xf32>
    %c0_7 = arith.constant 0 : index
    %c0_8 = arith.constant 0 : index
    %c0_9 = arith.constant 0 : index
    %16 = vector.load %arg2[%c0_7, %c0_8, %c0_9] : memref<3x128x128xbf16, #tpu.memory_space<vmem>>, vector<1x128x128xbf16>
    %17 = vector.shape_cast %16 : vector<1x128x128xbf16> to vector<128x128xbf16>
    %c0_10 = arith.constant 0 : index
    %c2 = arith.constant 2 : index
    %18 = vector.load %arg3[%c0_10, %c2] : memref<128x8xf32, #tpu.memory_space<vmem>>, vector<128x1xf32>
    %19 = arith.truncf %15 : vector<128x128xf32> to vector<128x128xbf16>
    %cst_11 = arith.constant dense<0.000000e+00> : vector<128x128xf32>
    %20 = tpu.matmul %17, %19, %cst_11 {dimension_numbers = #tpu.dot_dimension_numbers<[1], [0], [0], [1], [0, 0, 1, 1], [], []>} : vector<128x128xbf16>, vector<128x128xbf16>, vector<128x128xf32> -> vector<128x128xf32>
    %21 = vector.broadcast %18 : vector<128x1xf32> to vector<128x128xf32>
    %22 = arith.addf %20, %21 : vector<128x128xf32>
    %cst_12 = arith.constant 5.000000e-01 : f32
    %23 = vector.broadcast %cst_12 : f32 to vector<128x128xf32>
    %24 = arith.mulf %23, %22 : vector<128x128xf32>
    %25 = math.tanh %24 : vector<128x128xf32>
    %cst_13 = arith.constant 5.000000e-01 : f32
    %26 = vector.broadcast %cst_13 : f32 to vector<128x128xf32>
    %27 = arith.mulf %26, %25 : vector<128x128xf32>
    %cst_14 = arith.constant 5.000000e-01 : f32
    %28 = vector.broadcast %cst_14 : f32 to vector<128x128xf32>
    %29 = arith.addf %27, %28 : vector<128x128xf32>
    %c1_15 = arith.constant 1 : index
    %c0_16 = arith.constant 0 : index
    %c0_17 = arith.constant 0 : index
    %30 = vector.load %arg2[%c1_15, %c0_16, %c0_17] : memref<3x128x128xbf16, #tpu.memory_space<vmem>>, vector<1x128x128xbf16>
    %31 = vector.shape_cast %30 : vector<1x128x128xbf16> to vector<128x128xbf16>
    %c0_18 = arith.constant 0 : index
    %c3 = arith.constant 3 : index
    %32 = vector.load %arg3[%c0_18, %c3] : memref<128x8xf32, #tpu.memory_space<vmem>>, vector<128x1xf32>
    %33 = arith.truncf %29 : vector<128x128xf32> to vector<128x128xbf16>
    %cst_19 = arith.constant dense<0.000000e+00> : vector<128x128xf32>
    %34 = tpu.matmul %31, %33, %cst_19 {dimension_numbers = #tpu.dot_dimension_numbers<[1], [0], [0], [1], [0, 0, 1, 1], [], []>} : vector<128x128xbf16>, vector<128x128xbf16>, vector<128x128xf32> -> vector<128x128xf32>
    %35 = vector.broadcast %32 : vector<128x1xf32> to vector<128x128xf32>
    %36 = arith.addf %34, %35 : vector<128x128xf32>
    %cst_20 = arith.constant 5.000000e-01 : f32
    %37 = vector.broadcast %cst_20 : f32 to vector<128x128xf32>
    %38 = arith.mulf %37, %36 : vector<128x128xf32>
    %39 = math.tanh %38 : vector<128x128xf32>
    %cst_21 = arith.constant 5.000000e-01 : f32
    %40 = vector.broadcast %cst_21 : f32 to vector<128x128xf32>
    %41 = arith.mulf %40, %39 : vector<128x128xf32>
    %cst_22 = arith.constant 5.000000e-01 : f32
    %42 = vector.broadcast %cst_22 : f32 to vector<128x128xf32>
    %43 = arith.addf %41, %42 : vector<128x128xf32>
    %c2_23 = arith.constant 2 : index
    %c0_24 = arith.constant 0 : index
    %c0_25 = arith.constant 0 : index
    %44 = vector.load %arg2[%c2_23, %c0_24, %c0_25] : memref<3x128x128xbf16, #tpu.memory_space<vmem>>, vector<1x128x128xbf16>
    %45 = vector.shape_cast %44 : vector<1x128x128xbf16> to vector<128x128xbf16>
    %c0_26 = arith.constant 0 : index
    %c4 = arith.constant 4 : index
    %46 = vector.load %arg3[%c0_26, %c4] : memref<128x8xf32, #tpu.memory_space<vmem>>, vector<128x1xf32>
    %47 = arith.truncf %43 : vector<128x128xf32> to vector<128x128xbf16>
    %cst_27 = arith.constant dense<0.000000e+00> : vector<128x128xf32>
    %48 = tpu.matmul %45, %47, %cst_27 {dimension_numbers = #tpu.dot_dimension_numbers<[1], [0], [0], [1], [0, 0, 1, 1], [], []>} : vector<128x128xbf16>, vector<128x128xbf16>, vector<128x128xf32> -> vector<128x128xf32>
    %49 = vector.broadcast %46 : vector<128x1xf32> to vector<128x128xf32>
    %50 = arith.addf %48, %49 : vector<128x128xf32>
    %cst_28 = arith.constant 5.000000e-01 : f32
    %51 = vector.broadcast %cst_28 : f32 to vector<128x128xf32>
    %52 = arith.mulf %51, %50 : vector<128x128xf32>
    %53 = math.tanh %52 : vector<128x128xf32>
    %cst_29 = arith.constant 5.000000e-01 : f32
    %54 = vector.broadcast %cst_29 : f32 to vector<128x128xf32>
    %55 = arith.mulf %54, %53 : vector<128x128xf32>
    %cst_30 = arith.constant 5.000000e-01 : f32
    %56 = vector.broadcast %cst_30 : f32 to vector<128x128xf32>
    %57 = arith.addf %55, %56 : vector<128x128xf32>
    %c0_31 = arith.constant 0 : index
    %c5 = arith.constant 5 : index
    %58 = vector.load %arg3[%c0_31, %c5] : memref<128x8xf32, #tpu.memory_space<vmem>>, vector<128x1xf32>
    %c0_32 = arith.constant 0 : index
    %c6 = arith.constant 6 : index
    %59 = vector.load %arg3[%c0_32, %c6] : memref<128x8xf32, #tpu.memory_space<vmem>>, vector<1x1xf32>
    %60 = vector.broadcast %58 : vector<128x1xf32> to vector<128x128xf32>
    %61 = arith.mulf %57, %60 : vector<128x128xf32>
    %cst_33 = arith.constant dense<0.000000e+00> : vector<128xf32>
    %62 = vector.multi_reduction <add>, %61, %cst_33 [0] : vector<128x128xf32> to vector<128xf32>
    %63 = vector.shape_cast %62 : vector<128xf32> to vector<1x128xf32>
    %64 = vector.broadcast %59 : vector<1x1xf32> to vector<1x128xf32>
    %65 = arith.addf %63, %64 : vector<1x128xf32>
    %cst_34 = arith.constant 5.000000e-01 : f32
    %66 = vector.broadcast %cst_34 : f32 to vector<1x128xf32>
    %67 = arith.mulf %66, %65 : vector<1x128xf32>
    %68 = math.tanh %67 : vector<1x128xf32>
    %cst_35 = arith.constant 5.000000e-01 : f32
    %69 = vector.broadcast %cst_35 : f32 to vector<1x128xf32>
    %70 = arith.mulf %69, %68 : vector<1x128xf32>
    %cst_36 = arith.constant 5.000000e-01 : f32
    %71 = vector.broadcast %cst_36 : f32 to vector<1x128xf32>
    %72 = arith.addf %70, %71 : vector<1x128xf32>
    %73 = vector.shape_cast %72 : vector<1x128xf32> to vector<1x1x128xf32>
    %c0_37 = arith.constant 0 : index
    %c0_38 = arith.constant 0 : index
    %c0_39 = arith.constant 0 : index
    %74 = vector.load %arg4[%c0_37, %c0_38, %c0_39] : memref<1x1x128xf32, #tpu.memory_space<vmem>>, vector<1x1x128xf32>
    tpu.vector_store %arg4[%c0_37, %c0_38, %c0_39], %73 {strides = array<i32>} : memref<1x1x128xf32, #tpu.memory_space<vmem>>, vector<1x1x128xf32>,
    return
  }
  func.func @transform_0(%arg0: i32) -> (i32, i32, i32) {
    %c0_i32 = arith.constant 0 : i32
    %c0_i32_0 = arith.constant 0 : i32
    %c0_i32_1 = arith.constant 0 : i32
    return %arg0, %c0_i32, %c0_i32_0 : i32, i32, i32
  }
  func.func @transform_1(%arg0: i32) -> (i32, i32, i32) {
    %c0_i32 = arith.constant 0 : i32
    %c0_i32_0 = arith.constant 0 : i32
    %c0_i32_1 = arith.constant 0 : i32
    %c0_i32_2 = arith.constant 0 : i32
    return %c0_i32, %c0_i32_0, %c0_i32_1 : i32, i32, i32
  }
  func.func @transform_2(%arg0: i32) -> (i32, i32) {
    %c0_i32 = arith.constant 0 : i32
    %c0_i32_0 = arith.constant 0 : i32
    %c0_i32_1 = arith.constant 0 : i32
    return %c0_i32, %c0_i32_0 : i32, i32
  }
  func.func @transform_3(%arg0: i32) -> (i32, i32, i32) {
    %c0_i32 = arith.constant 0 : i32
    %c0_i32_0 = arith.constant 0 : i32
    %c0_i32_1 = arith.constant 0 : i32
    return %arg0, %c0_i32, %c0_i32_0 : i32, i32, i32
  }
}

</mosaic_0001>

<llo_original>
// kernel: tpu_custom_call.1
$region0: #{tpu_custom_call.1}
  #allocation0 [shape = 'u32[]', space=smem, size = 0x4, offset = 0x4, fixed_abs, tag = 'smem constant byte address 0x4 - core index']
  #allocation1 [shape = 'u32[144,128]{1,0:T(1,128)}', space=vmem, size = 0x12000, scoped, tag = 'internal scratch']
  %s0 = inlined_call_operand.vmem [shape: f32[1,1,128], index: 0, kind: input, shape index: {}]
  %s1 = inlined_call_operand.hbm [shape: bf16[3,128,128], index: 1, kind: input, shape index: {}]
  %s2 = inlined_call_operand.vmem [shape: f32[128,8], index: 2, kind: input, shape index: {}]
  %s3 = inlined_call_operand.hbm [shape: f32[1,1,128], index: 3, kind: output, shape index: {}]
  %s4 = sld [smem:[#allocation0]]
  $region26: #{tpu_custom_call.1} parent=0
    _
  %s6 = ssub.s32 1, %s4
  %s7 = scalar_select 0, %s6, %s4
  $region1: #{tpu_custom_call.1} parent=0
    #allocation2 [shape = 'u8[98304]{0}', space=vmem, size = 0x18000, scoped, tag = 'input window, operand 1, single buffered']
    #allocation3 [shape = 's32[1]{0}', space=sflag, size = 0x4, scoped, tag = 'scoped memory for tpu_custom_call.1']
    #allocation4 [shape = 's32[1]{0}', space=sflag, size = 0x4, scoped, tag = 'scoped memory for tpu_custom_call.1']
    #allocation5 [shape = 'u8[512]{0}', space=vmem, size = 0x400, scoped, tag = 'output window, operand 0, single buffered']
    %8 = vsyncpa [#allocation3], 0
    %9 = vsyncpa [#allocation4], 0
    // Predicated region
    $region2: #{tpu_custom_call.1} parent=1 // pred_check
      _
    $region3: #{tpu_custom_call.1} parent=1 // pred_check_branch
      %11 = sbr.rel (0) target = $region5
    $region4: #{tpu_custom_call.1} parent=1 // pred_region
      _
    $region5: #{tpu_custom_call.1} parent=1 // pred_fallthru
      _
    // Predicated region
    $region6: #{tpu_custom_call.1} parent=1 // pred_check
      _
    $region7: #{tpu_custom_call.1} parent=1 // pred_check_branch
      %13 = sbr.rel (0) target = $region9
    $region8: #{tpu_custom_call.1} parent=1 // pred_region
      %s15 = ssub.s32 3072, 3072
      %16 = vsyncadd [#allocation3], %s15
      %s17 = sshll.u32 [#allocation2], 4
      %s18 = int_to_ptr.vmem [resolvable:$true] %s17
      %23 = dma.hbm_to_vmem [thread:$0]  %s1, 3072, %s18, [#allocation3], 64, 64, 4
    $region9: #{tpu_custom_call.1} parent=1 // pred_fallthru
      _
    // Predicated region
    $region10: #{tpu_custom_call.1} parent=1 // pred_check
      _
    $region11: #{tpu_custom_call.1} parent=1 // pred_check_branch
      %25 = sbr.rel (0) target = $region13
    $region12: #{tpu_custom_call.1} parent=1 // pred_region
      _
    $region13: #{tpu_custom_call.1} parent=1 // pred_fallthru
      _
    // Predicated region
    $region14: #{tpu_custom_call.1} parent=1 // pred_check
      _
    $region15: #{tpu_custom_call.1} parent=1 // pred_check_branch
      %27 = sbr.rel (0) target = $region17
    $region16: #{tpu_custom_call.1} parent=1 // pred_region
      %28 = dma.done [#allocation3], 3072
    $region17: #{tpu_custom_call.1} parent=1 // pred_fallthru
      _
    %v30 = vld [vmem:[%s0] sm:$0x1]
    %v31 = vld [vmem:[%s2] sm:$0xff]
    %v32 = vld [vmem:[%s2 + $0x8] sm:$0xff]
    %v33 = vld [vmem:[%s2 + $0x10] sm:$0xff]
    %v34 = vld [vmem:[%s2 + $0x18] sm:$0xff]
    %v35 = vld [vmem:[%s2 + $0x20] sm:$0xff]
    %v36 = vld [vmem:[%s2 + $0x28] sm:$0xff]
    %v37 = vld [vmem:[%s2 + $0x30] sm:$0xff]
    %v38 = vld [vmem:[%s2 + $0x38] sm:$0xff]
    %v39 = vld [vmem:[%s2 + $0x40] sm:$0xff]
    %v40 = vld [vmem:[%s2 + $0x48] sm:$0xff]
    %v41 = vld [vmem:[%s2 + $0x50] sm:$0xff]
    %v42 = vld [vmem:[%s2 + $0x58] sm:$0xff]
    %v43 = vld [vmem:[%s2 + $0x60] sm:$0xff]
    %v44 = vld [vmem:[%s2 + $0x68] sm:$0xff]
    %v45 = vld [vmem:[%s2 + $0x70] sm:$0xff]
    %v46 = vld [vmem:[%s2 + $0x78] sm:$0xff]
    %48 = vset.pattern.permute.xlu0 0
    %49 = vperm.xlu0 %48, %v31
    %v50 = vpop.permute.xlu0 %49
    %53 = vset.pattern.permute.xlu0 0
    %54 = vperm.xlu0 %53, %v32
    %v55 = vpop.permute.xlu0 %54
    %58 = vset.pattern.permute.xlu0 0
    %59 = vperm.xlu0 %58, %v33
    %v60 = vpop.permute.xlu0 %59
    %63 = vset.pattern.permute.xlu0 0
    %64 = vperm.xlu0 %63, %v34
    %v65 = vpop.permute.xlu0 %64
    %68 = vset.pattern.permute.xlu0 0
    %69 = vperm.xlu0 %68, %v35
    %v70 = vpop.permute.xlu0 %69
    %73 = vset.pattern.permute.xlu0 0
    %74 = vperm.xlu0 %73, %v36
    %v75 = vpop.permute.xlu0 %74
    %78 = vset.pattern.permute.xlu0 0
    %79 = vperm.xlu0 %78, %v37
    %v80 = vpop.permute.xlu0 %79
    %83 = vset.pattern.permute.xlu0 0
    %84 = vperm.xlu0 %83, %v38
    %v85 = vpop.permute.xlu0 %84
    %88 = vset.pattern.permute.xlu0 0
    %89 = vperm.xlu0 %88, %v39
    %v90 = vpop.permute.xlu0 %89
    %93 = vset.pattern.permute.xlu0 0
    %94 = vperm.xlu0 %93, %v40
    %v95 = vpop.permute.xlu0 %94
    %98 = vset.pattern.permute.xlu0 0
    %99 = vperm.xlu0 %98, %v41
    %v100 = vpop.permute.xlu0 %99
    %103 = vset.pattern.permute.xlu0 0
    %104 = vperm.xlu0 %103, %v42
    %v105 = vpop.permute.xlu0 %104
    %108 = vset.pattern.permute.xlu0 0
    %109 = vperm.xlu0 %108, %v43
    %v110 = vpop.permute.xlu0 %109
    %113 = vset.pattern.permute.xlu0 0
    %114 = vperm.xlu0 %113, %v44
    %v115 = vpop.permute.xlu0 %114
    %118 = vset.pattern.permute.xlu0 0
    %119 = vperm.xlu0 %118, %v45
    %v120 = vpop.permute.xlu0 %119
    %123 = vset.pattern.permute.xlu0 0
    %124 = vperm.xlu0 %123, %v46
    %v125 = vpop.permute.xlu0 %124
    %v128 = vlaneseq
    %v129 = vshrl.u32 %v128, 7
    %v130 = vsub.s32 0, %v129
    %v131 = vrot.slane %v30, %v130
    %v133 = vmul.f32 %v50, %v131
    %v134 = vmul.f32 %v55, %v131
    %v135 = vmul.f32 %v60, %v131
    %v136 = vmul.f32 %v65, %v131
    %v137 = vmul.f32 %v70, %v131
    %v138 = vmul.f32 %v75, %v131
    %v139 = vmul.f32 %v80, %v131
    %v140 = vmul.f32 %v85, %v131
    %v141 = vmul.f32 %v90, %v131
    %v142 = vmul.f32 %v95, %v131
    %v143 = vmul.f32 %v100, %v131
    %v144 = vmul.f32 %v105, %v131
    %v145 = vmul.f32 %v110, %v131
    %v146 = vmul.f32 %v115, %v131
    %v147 = vmul.f32 %v120, %v131
    %v148 = vmul.f32 %v125, %v131
    %149 = vset.pattern.permute.xlu0 1
    %150 = vperm.xlu0 %149, %v31
    %v151 = vpop.permute.xlu0 %150
    %153 = vset.pattern.permute.xlu0 1
    %154 = vperm.xlu0 %153, %v32
    %v155 = vpop.permute.xlu0 %154
    %157 = vset.pattern.permute.xlu0 1
    %158 = vperm.xlu0 %157, %v33
    %v159 = vpop.permute.xlu0 %158
    %161 = vset.pattern.permute.xlu0 1
    %162 = vperm.xlu0 %161, %v34
    %v163 = vpop.permute.xlu0 %162
    %165 = vset.pattern.permute.xlu0 1
    %166 = vperm.xlu0 %165, %v35
    %v167 = vpop.permute.xlu0 %166
    %169 = vset.pattern.permute.xlu0 1
    %170 = vperm.xlu0 %169, %v36
    %v171 = vpop.permute.xlu0 %170
    %173 = vset.pattern.permute.xlu0 1
    %174 = vperm.xlu0 %173, %v37
    %v175 = vpop.permute.xlu0 %174
    %177 = vset.pattern.permute.xlu0 1
    %178 = vperm.xlu0 %177, %v38
    %v179 = vpop.permute.xlu0 %178
    %181 = vset.pattern.permute.xlu0 1
    %182 = vperm.xlu0 %181, %v39
    %v183 = vpop.permute.xlu0 %182
    %185 = vset.pattern.permute.xlu0 1
    %186 = vperm.xlu0 %185, %v40
    %v187 = vpop.permute.xlu0 %186
    %189 = vset.pattern.permute.xlu0 1
    %190 = vperm.xlu0 %189, %v41
    %v191 = vpop.permute.xlu0 %190
    %193 = vset.pattern.permute.xlu0 1
    %194 = vperm.xlu0 %193, %v42
    %v195 = vpop.permute.xlu0 %194
    %197 = vset.pattern.permute.xlu0 1
    %198 = vperm.xlu0 %197, %v43
    %v199 = vpop.permute.xlu0 %198
    %201 = vset.pattern.permute.xlu0 1
    %202 = vperm.xlu0 %201, %v44
    %v203 = vpop.permute.xlu0 %202
    %205 = vset.pattern.permute.xlu0 1
    %206 = vperm.xlu0 %205, %v45
    %v207 = vpop.permute.xlu0 %206
    %209 = vset.pattern.permute.xlu0 1
    %210 = vperm.xlu0 %209, %v46
    %v211 = vpop.permute.xlu0 %210
    %v213 = vadd.f32 %v133, %v151
    %v214 = vadd.f32 %v134, %v155
    %v215 = vadd.f32 %v135, %v159
    %v216 = vadd.f32 %v136, %v163
    %v217 = vadd.f32 %v137, %v167
    %v218 = vadd.f32 %v138, %v171
    %v219 = vadd.f32 %v139, %v175
    %v220 = vadd.f32 %v140, %v179
    %v221 = vadd.f32 %v141, %v183
    %v222 = vadd.f32 %v142, %v187
    %v223 = vadd.f32 %v143, %v191
    %v224 = vadd.f32 %v144, %v195
    %v225 = vadd.f32 %v145, %v199
    %v226 = vadd.f32 %v146, %v203
    %v227 = vadd.f32 %v147, %v207
    %v228 = vadd.f32 %v148, %v211
    %v229 = vmul.f32 %v213, 0.5
    %v230 = vmul.f32 %v214, 0.5
    %v231 = vmul.f32 %v215, 0.5
    %v232 = vmul.f32 %v216, 0.5
    %v233 = vmul.f32 %v217, 0.5
    %v234 = vmul.f32 %v218, 0.5
    %v235 = vmul.f32 %v219, 0.5
    %v236 = vmul.f32 %v220, 0.5
    %v237 = vmul.f32 %v221, 0.5
    %v238 = vmul.f32 %v222, 0.5
    %v239 = vmul.f32 %v223, 0.5
    %v240 = vmul.f32 %v224, 0.5
    %v241 = vmul.f32 %v225, 0.5
    %v242 = vmul.f32 %v226, 0.5
    %v243 = vmul.f32 %v227, 0.5
    %v244 = vmul.f32 %v228, 0.5
    %v245 = vtanh.pop %v229
    %v246 = vtanh.pop %v230
    %v247 = vtanh.pop %v231
    %v248 = vtanh.pop %v232
    %v249 = vtanh.pop %v233
    %v250 = vtanh.pop %v234
    %v251 = vtanh.pop %v235
    %v252 = vtanh.pop %v236
    %v253 = vtanh.pop %v237
    %v254 = vtanh.pop %v238
    %v255 = vtanh.pop %v239
    %v256 = vtanh.pop %v240
    %v257 = vtanh.pop %v241
    %v258 = vtanh.pop %v242
    %v259 = vtanh.pop %v243
    %v260 = vtanh.pop %v244
    %v261 = vmul.f32 %v245, 0.5
    %v262 = vmul.f32 %v246, 0.5
    %v263 = vmul.f32 %v247, 0.5
    %v264 = vmul.f32 %v248, 0.5
    %v265 = vmul.f32 %v249, 0.5
    %v266 = vmul.f32 %v250, 0.5
    %v267 = vmul.f32 %v251, 0.5
    %v268 = vmul.f32 %v252, 0.5
    %v269 = vmul.f32 %v253, 0.5
    %v270 = vmul.f32 %v254, 0.5
    %v271 = vmul.f32 %v255, 0.5
    %v272 = vmul.f32 %v256, 0.5
    %v273 = vmul.f32 %v257, 0.5
    %v274 = vmul.f32 %v258, 0.5
    %v275 = vmul.f32 %v259, 0.5
    %v276 = vmul.f32 %v260, 0.5
    %v277 = vadd.f32 %v261, 0.5
    %v278 = vadd.f32 %v262, 0.5
    %v279 = vadd.f32 %v263, 0.5
    %v280 = vadd.f32 %v264, 0.5
    %v281 = vadd.f32 %v265, 0.5
    %v282 = vadd.f32 %v266, 0.5
    %v283 = vadd.f32 %v267, 0.5
    %v284 = vadd.f32 %v268, 0.5
    %v285 = vadd.f32 %v269, 0.5
    %v286 = vadd.f32 %v270, 0.5
    %v287 = vadd.f32 %v271, 0.5
    %v288 = vadd.f32 %v272, 0.5
    %v289 = vadd.f32 %v273, 0.5
    %v290 = vadd.f32 %v274, 0.5
    %v291 = vadd.f32 %v275, 0.5
    %v292 = vadd.f32 %v276, 0.5
    %v293 = vld [vmem:[#allocation2] sm:$0xf]
    %v294 = vld [vmem:[#allocation2 + $0x4] sm:$0xf]
    %v295 = vld [vmem:[#allocation2 + $0x8] sm:$0xf]
    %v296 = vld [vmem:[#allocation2 + $0xc] sm:$0xf]
    %v297 = vld [vmem:[#allocation2 + $0x10] sm:$0xf]
    %v298 = vld [vmem:[#allocation2 + $0x14] sm:$0xf]
    %v299 = vld [vmem:[#allocation2 + $0x18] sm:$0xf]
    %v300 = vld [vmem:[#allocation2 + $0x1c] sm:$0xf]
    %v301 = vld [vmem:[#allocation2 + $0x20] sm:$0xf]
    %v302 = vld [vmem:[#allocation2 + $0x24] sm:$0xf]
    %v303 = vld [vmem:[#allocation2 + $0x28] sm:$0xf]
    %v304 = vld [vmem:[#allocation2 + $0x2c] sm:$0xf]
    %v305 = vld [vmem:[#allocation2 + $0x30] sm:$0xf]
    %v306 = vld [vmem:[#allocation2 + $0x34] sm:$0xf]
    %v307 = vld [vmem:[#allocation2 + $0x38] sm:$0xf]
    %v308 = vld [vmem:[#allocation2 + $0x3c] sm:$0xf]
    %v309 = vpack.c.bf16 %v278, %v277
    %v310 = vpack.c.bf16 %v280, %v279
    %v311 = vpack.c.bf16 %v282, %v281
    %v312 = vpack.c.bf16 %v284, %v283
    %v313 = vpack.c.bf16 %v286, %v285
    %v314 = vpack.c.bf16 %v288, %v287
    %v315 = vpack.c.bf16 %v290, %v289
    %v316 = vpack.c.bf16 %v292, %v291
    %317 = vset.pattern.permute.xlu0 2
    %318 = vperm.xlu0 %317, %v31
    %v319 = vpop.permute.xlu0 %318
    %321 = vset.pattern.permute.xlu0 2
    %322 = vperm.xlu0 %321, %v32
    %v323 = vpop.permute.xlu0 %322
    %325 = vset.pattern.permute.xlu0 2
    %326 = vperm.xlu0 %325, %v33
    %v327 = vpop.permute.xlu0 %326
    %329 = vset.pattern.permute.xlu0 2
    %330 = vperm.xlu0 %329, %v34
    %v331 = vpop.permute.xlu0 %330
    %333 = vset.pattern.permute.xlu0 2
    %334 = vperm.xlu0 %333, %v35
    %v335 = vpop.permute.xlu0 %334
    %337 = vset.pattern.permute.xlu0 2
    %338 = vperm.xlu0 %337, %v36
    %v339 = vpop.permute.xlu0 %338
    %341 = vset.pattern.permute.xlu0 2
    %342 = vperm.xlu0 %341, %v37
    %v343 = vpop.permute.xlu0 %342
    %345 = vset.pattern.permute.xlu0 2
    %346 = vperm.xlu0 %345, %v38
    %v347 = vpop.permute.xlu0 %346
    %349 = vset.pattern.permute.xlu0 2
    %350 = vperm.xlu0 %349, %v39
    %v351 = vpop.permute.xlu0 %350
    %353 = vset.pattern.permute.xlu0 2
    %354 = vperm.xlu0 %353, %v40
    %v355 = vpop.permute.xlu0 %354
    %357 = vset.pattern.permute.xlu0 2
    %358 = vperm.xlu0 %357, %v41
    %v359 = vpop.permute.xlu0 %358
    %361 = vset.pattern.permute.xlu0 2
    %362 = vperm.xlu0 %361, %v42
    %v363 = vpop.permute.xlu0 %362
    %365 = vset.pattern.permute.xlu0 2
    %366 = vperm.xlu0 %365, %v43
    %v367 = vpop.permute.xlu0 %366
    %369 = vset.pattern.permute.xlu0 2
    %370 = vperm.xlu0 %369, %v44
    %v371 = vpop.permute.xlu0 %370
    %373 = vset.pattern.permute.xlu0 2
    %374 = vperm.xlu0 %373, %v45
    %v375 = vpop.permute.xlu0 %374
    %377 = vset.pattern.permute.xlu0 2
    %378 = vperm.xlu0 %377, %v46
    %v379 = vpop.permute.xlu0 %378
    %v397 = vunpack.c.l.b16 %v293
    %v398 = vunpack.c.l.b16 %v294
    %v399 = vunpack.c.l.b16 %v295
    %v400 = vunpack.c.l.b16 %v296
    %v401 = vunpack.c.l.b16 %v297
    %v402 = vunpack.c.l.b16 %v298
    %v403 = vunpack.c.l.b16 %v299
    %v404 = vunpack.c.l.b16 %v300
    %v405 = vunpack.c.l.b16 %v301
    %v406 = vunpack.c.l.b16 %v302
    %v407 = vunpack.c.l.b16 %v303
    %v408 = vunpack.c.l.b16 %v304
    %v409 = vunpack.c.l.b16 %v305
    %v410 = vunpack.c.l.b16 %v306
    %v411 = vunpack.c.l.b16 %v307
    %v412 = vunpack.c.l.b16 %v308
    %v413 = vpack.c.b16 %v398, %v397
    %v414 = vpack.c.b16 %v400, %v399
    %v415 = vpack.c.b16 %v402, %v401
    %v416 = vpack.c.b16 %v404, %v403
    %v417 = vpack.c.b16 %v406, %v405
    %v418 = vpack.c.b16 %v408, %v407
    %v419 = vpack.c.b16 %v410, %v409
    %v420 = vpack.c.b16 %v412, %v411
    %429 = vmatprep.subr.bf16.mxu0 0
    %430 = vmatpush1.bf16.msra.mxu0 %v309
    %431 = vmatprep.subr.bf16.mxu0 0
    %432 = vmatpush1.bf16.msra.mxu0 %v310
    %433 = vmatprep.subr.bf16.mxu0 0
    %434 = vmatpush1.bf16.msra.mxu0 %v311
    %435 = vmatprep.subr.bf16.mxu0 0
    %436 = vmatpush1.bf16.msra.mxu0 %v312
    %437 = vmatprep.subr.bf16.mxu0 0
    %438 = vmatpush1.bf16.msra.mxu0 %v313
    %439 = vmatprep.subr.bf16.mxu0 0
    %440 = vmatpush1.bf16.msra.mxu0 %v314
    %441 = vmatprep.subr.bf16.mxu0 0
    %442 = vmatpush1.bf16.msra.mxu0 %v315
    %443 = vmatprep.subr.bf16.mxu0 0
    %444 = vmatpush1.bf16.msra.mxu0 %v316
    %445 = vmatprep.subr.bf16.mxu0 0
    %446 = vmatpush1.bf16.msra.mxu0 0
    %447 = vmatprep.subr.bf16.mxu0 0
    %448 = vmatpush1.bf16.msra.mxu0 0
    %449 = vmatprep.subr.bf16.mxu0 0
    %450 = vmatpush1.bf16.msra.mxu0 0
    %451 = vmatprep.subr.bf16.mxu0 0
    %452 = vmatpush1.bf16.msra.mxu0 0
    %453 = vmatprep.subr.bf16.mxu0 0
    %454 = vmatpush1.bf16.msra.mxu0 0
    %455 = vmatprep.subr.bf16.mxu0 0
    %456 = vmatpush1.bf16.msra.mxu0 0
    %457 = vmatprep.subr.bf16.mxu0 0
    %458 = vmatpush1.bf16.msra.mxu0 0
    %459 = vmatprep.subr.bf16.mxu0 0
    %460 = vmatpush1.bf16.msra.mxu0 0
    %461 = vmatprep.mubr.bf16.mxu0 0
    %462 = vmatmul.mubr.bf16.gmra.mrb[0].mxu0 %v413
    %v463 = vpop.f32.mrb[0].mxu0
    %v464 = vadd.f32 %v319, %v463
    %v465 = vpop.f32.mrb[0].mxu0
    %v466 = vpop.f32.mrb[0].mxu0
    %v467 = vadd.f32 %v323, %v466
    %v468 = vpop.f32.mrb[0].mxu0
    %469 = vmatprep.mubr.bf16.mxu0 0
    %470 = vmatmul.mubr.bf16.gmra.mrb[0].mxu0 %v414
    %v471 = vpop.f32.mrb[0].mxu0
    %v472 = vadd.f32 %v327, %v471
    %v473 = vpop.f32.mrb[0].mxu0
    %v474 = vpop.f32.mrb[0].mxu0
    %v475 = vadd.f32 %v331, %v474
    %v476 = vpop.f32.mrb[0].mxu0
    %477 = vmatprep.mubr.bf16.mxu0 0
    %478 = vmatmul.mubr.bf16.gmra.mrb[0].mxu0 %v415
    %v479 = vpop.f32.mrb[0].mxu0
    %v480 = vadd.f32 %v335, %v479
    %v481 = vpop.f32.mrb[0].mxu0
    %v482 = vpop.f32.mrb[0].mxu0
    %v483 = vadd.f32 %v339, %v482
    %v484 = vpop.f32.mrb[0].mxu0
    %485 = vmatprep.mubr.bf16.mxu0 0
    %486 = vmatmul.mubr.bf16.gmra.mrb[0].mxu0 %v416
    %v487 = vpop.f32.mrb[0].mxu0
    %v488 = vadd.f32 %v343, %v487
    %v489 = vpop.f32.mrb[0].mxu0
    %v490 = vpop.f32.mrb[0].mxu0
    %v491 = vadd.f32 %v347, %v490
    %v492 = vpop.f32.mrb[0].mxu0
    %493 = vmatprep.mubr.bf16.mxu0 0
    %494 = vmatmul.mubr.bf16.gmra.mrb[0].mxu0 %v417
    %v495 = vpop.f32.mrb[0].mxu0
    %v496 = vadd.f32 %v351, %v495
    %v497 = vpop.f32.mrb[0].mxu0
    %v498 = vpop.f32.mrb[0].mxu0
    %v499 = vadd.f32 %v355, %v498
    %v500 = vpop.f32.mrb[0].mxu0
    %501 = vmatprep.mubr.bf16.mxu0 0
    %502 = vmatmul.mubr.bf16.gmra.mrb[0].mxu0 %v418
    %v503 = vpop.f32.mrb[0].mxu0
    %v504 = vadd.f32 %v359, %v503
    %v505 = vpop.f32.mrb[0].mxu0
    %v506 = vpop.f32.mrb[0].mxu0
    %v507 = vadd.f32 %v363, %v506
    %v508 = vpop.f32.mrb[0].mxu0
    %509 = vmatprep.mubr.bf16.mxu0 0
    %510 = vmatmul.mubr.bf16.gmra.mrb[0].mxu0 %v419
    %v511 = vpop.f32.mrb[0].mxu0
    %v512 = vadd.f32 %v367, %v511
    %v513 = vpop.f32.mrb[0].mxu0
    %v514 = vpop.f32.mrb[0].mxu0
    %v515 = vadd.f32 %v371, %v514
    %v516 = vpop.f32.mrb[0].mxu0
    %517 = vmatprep.mubr.bf16.mxu0 0
    %518 = vmatmul.mubr.bf16.gmra.mrb[0].mxu0 %v420
    %v519 = vpop.f32.mrb[0].mxu0
    %v520 = vadd.f32 %v375, %v519
    %v521 = vpop.f32.mrb[0].mxu0
    %v522 = vpop.f32.mrb[0].mxu0
    %v523 = vadd.f32 %v379, %v522
    %v524 = vpop.f32.mrb[0].mxu0
    %525 = vdwg.mxu0
    %v526 = vmul.f32 %v464, 0.5
    %v527 = vmul.f32 %v467, 0.5
    %v528 = vmul.f32 %v472, 0.5
    %v529 = vmul.f32 %v475, 0.5
    %v530 = vmul.f32 %v480, 0.5
    %v531 = vmul.f32 %v483, 0.5
    %v532 = vmul.f32 %v488, 0.5
    %v533 = vmul.f32 %v491, 0.5
    %v534 = vmul.f32 %v496, 0.5
    %v535 = vmul.f32 %v499, 0.5
    %v536 = vmul.f32 %v504, 0.5
    %v537 = vmul.f32 %v507, 0.5
    %v538 = vmul.f32 %v512, 0.5
    %v539 = vmul.f32 %v515, 0.5
    %v540 = vmul.f32 %v520, 0.5
    %v541 = vmul.f32 %v523, 0.5
    %v542 = vtanh.pop %v526
    %v543 = vtanh.pop %v527
    %v544 = vtanh.pop %v528
    %v545 = vtanh.pop %v529
    %v546 = vtanh.pop %v530
    %v547 = vtanh.pop %v531
    %v548 = vtanh.pop %v532
    %v549 = vtanh.pop %v533
    %v550 = vtanh.pop %v534
    %v551 = vtanh.pop %v535
    %v552 = vtanh.pop %v536
    %v553 = vtanh.pop %v537
    %v554 = vtanh.pop %v538
    %v555 = vtanh.pop %v539
    %v556 = vtanh.pop %v540
    %v557 = vtanh.pop %v541
    %v558 = vmul.f32 %v542, 0.5
    %v559 = vmul.f32 %v543, 0.5
    %v560 = vmul.f32 %v544, 0.5
    %v561 = vmul.f32 %v545, 0.5
    %v562 = vmul.f32 %v546, 0.5
    %v563 = vmul.f32 %v547, 0.5
    %v564 = vmul.f32 %v548, 0.5
    %v565 = vmul.f32 %v549, 0.5
    %v566 = vmul.f32 %v550, 0.5
    %v567 = vmul.f32 %v551, 0.5
    %v568 = vmul.f32 %v552, 0.5
    %v569 = vmul.f32 %v553, 0.5
    %v570 = vmul.f32 %v554, 0.5
    %v571 = vmul.f32 %v555, 0.5
    %v572 = vmul.f32 %v556, 0.5
    %v573 = vmul.f32 %v557, 0.5
    %v574 = vadd.f32 %v558, 0.5
    %v575 = vadd.f32 %v559, 0.5
    %v576 = vadd.f32 %v560, 0.5
    %v577 = vadd.f32 %v561, 0.5
    %v578 = vadd.f32 %v562, 0.5
    %v579 = vadd.f32 %v563, 0.5
    %v580 = vadd.f32 %v564, 0.5
    %v581 = vadd.f32 %v565, 0.5
    %v582 = vadd.f32 %v566, 0.5
    %v583 = vadd.f32 %v567, 0.5
    %v584 = vadd.f32 %v568, 0.5
    %v585 = vadd.f32 %v569, 0.5
    %v586 = vadd.f32 %v570, 0.5
    %v587 = vadd.f32 %v571, 0.5
    %v588 = vadd.f32 %v572, 0.5
    %v589 = vadd.f32 %v573, 0.5
    %s590 = scalar_lea.vmem [#allocation2], 64
    %v591 = vld [vmem:[%s590] sm:$0xf]
    %v592 = vld [vmem:[%s590 + $0x4] sm:$0xf]
    %v593 = vld [vmem:[%s590 + $0x8] sm:$0xf]
    %v594 = vld [vmem:[%s590 + $0xc] sm:$0xf]
    %v595 = vld [vmem:[%s590 + $0x10] sm:$0xf]
    %v596 = vld [vmem:[%s590 + $0x14] sm:$0xf]
    %v597 = vld [vmem:[%s590 + $0x18] sm:$0xf]
    %v598 = vld [vmem:[%s590 + $0x1c] sm:$0xf]
    %v599 = vld [vmem:[%s590 + $0x20] sm:$0xf]
    %v600 = vld [vmem:[%s590 + $0x24] sm:$0xf]
    %v601 = vld [vmem:[%s590 + $0x28] sm:$0xf]
    %v602 = vld [vmem:[%s590 + $0x2c] sm:$0xf]
    %v603 = vld [vmem:[%s590 + $0x30] sm:$0xf]
    %v604 = vld [vmem:[%s590 + $0x34] sm:$0xf]
    %v605 = vld [vmem:[%s590 + $0x38] sm:$0xf]
    %v606 = vld [vmem:[%s590 + $0x3c] sm:$0xf]
    %v607 = vpack.c.bf16 %v575, %v574
    %v608 = vpack.c.bf16 %v577, %v576
    %v609 = vpack.c.bf16 %v579, %v578
    %v610 = vpack.c.bf16 %v581, %v580
    %v611 = vpack.c.bf16 %v583, %v582
    %v612 = vpack.c.bf16 %v585, %v584
    %v613 = vpack.c.bf16 %v587, %v586
    %v614 = vpack.c.bf16 %v589, %v588
    %615 = vset.pattern.permute.xlu0 3
    %616 = vperm.xlu0 %615, %v31
    %v617 = vpop.permute.xlu0 %616
    %619 = vset.pattern.permute.xlu0 3
    %620 = vperm.xlu0 %619, %v32
    %v621 = vpop.permute.xlu0 %620
    %623 = vset.pattern.permute.xlu0 3
    %624 = vperm.xlu0 %623, %v33
    %v625 = vpop.permute.xlu0 %624
    %627 = vset.pattern.permute.xlu0 3
    %628 = vperm.xlu0 %627, %v34
    %v629 = vpop.permute.xlu0 %628
    %631 = vset.pattern.permute.xlu0 3
    %632 = vperm.xlu0 %631, %v35
    %v633 = vpop.permute.xlu0 %632
    %635 = vset.pattern.permute.xlu0 3
    %636 = vperm.xlu0 %635, %v36
    %v637 = vpop.permute.xlu0 %636
    %639 = vset.pattern.permute.xlu0 3
    %640 = vperm.xlu0 %639, %v37
    %v641 = vpop.permute.xlu0 %640
    %643 = vset.pattern.permute.xlu0 3
    %644 = vperm.xlu0 %643, %v38
    %v645 = vpop.permute.xlu0 %644
    %647 = vset.pattern.permute.xlu0 3
    %648 = vperm.xlu0 %647, %v39
    %v649 = vpop.permute.xlu0 %648
    %651 = vset.pattern.permute.xlu0 3
    %652 = vperm.xlu0 %651, %v40
    %v653 = vpop.permute.xlu0 %652
    %655 = vset.pattern.permute.xlu0 3
    %656 = vperm.xlu0 %655, %v41
    %v657 = vpop.permute.xlu0 %656
    %659 = vset.pattern.permute.xlu0 3
    %660 = vperm.xlu0 %659, %v42
    %v661 = vpop.permute.xlu0 %660
    %663 = vset.pattern.permute.xlu0 3
    %664 = vperm.xlu0 %663, %v43
    %v665 = vpop.permute.xlu0 %664
    %667 = vset.pattern.permute.xlu0 3
    %668 = vperm.xlu0 %667, %v44
    %v669 = vpop.permute.xlu0 %668
    %671 = vset.pattern.permute.xlu0 3
    %672 = vperm.xlu0 %671, %v45
    %v673 = vpop.permute.xlu0 %672
    %675 = vset.pattern.permute.xlu0 3
    %676 = vperm.xlu0 %675, %v46
    %v677 = vpop.permute.xlu0 %676
    %v695 = vunpack.c.l.b16 %v591
    %v696 = vunpack.c.l.b16 %v592
    %v697 = vunpack.c.l.b16 %v593
    %v698 = vunpack.c.l.b16 %v594
    %v699 = vunpack.c.l.b16 %v595
    %v700 = vunpack.c.l.b16 %v596
    %v701 = vunpack.c.l.b16 %v597
    %v702 = vunpack.c.l.b16 %v598
    %v703 = vunpack.c.l.b16 %v599
    %v704 = vunpack.c.l.b16 %v600
    %v705 = vunpack.c.l.b16 %v601
    %v706 = vunpack.c.l.b16 %v602
    %v707 = vunpack.c.l.b16 %v603
    %v708 = vunpack.c.l.b16 %v604
    %v709 = vunpack.c.l.b16 %v605
    %v710 = vunpack.c.l.b16 %v606
    %v711 = vpack.c.b16 %v696, %v695
    %v712 = vpack.c.b16 %v698, %v697
    %v713 = vpack.c.b16 %v700, %v699
    %v714 = vpack.c.b16 %v702, %v701
    %v715 = vpack.c.b16 %v704, %v703
    %v716 = vpack.c.b16 %v706, %v705
    %v717 = vpack.c.b16 %v708, %v707
    %v718 = vpack.c.b16 %v710, %v709
    %727 = vmatprep.subr.bf16.mxu0 0
    %728 = vmatpush1.bf16.msra.mxu0 %v607
    %729 = vmatprep.subr.bf16.mxu0 0
    %730 = vmatpush1.bf16.msra.mxu0 %v608
    %731 = vmatprep.subr.bf16.mxu0 0
    %732 = vmatpush1.bf16.msra.mxu0 %v609
    %733 = vmatprep.subr.bf16.mxu0 0
    %734 = vmatpush1.bf16.msra.mxu0 %v610
    %735 = vmatprep.subr.bf16.mxu0 0
    %736 = vmatpush1.bf16.msra.mxu0 %v611
    %737 = vmatprep.subr.bf16.mxu0 0
    %738 = vmatpush1.bf16.msra.mxu0 %v612
    %739 = vmatprep.subr.bf16.mxu0 0
    %740 = vmatpush1.bf16.msra.mxu0 %v613
    %741 = vmatprep.subr.bf16.mxu0 0
    %742 = vmatpush1.bf16.msra.mxu0 %v614
    %743 = vmatprep.subr.bf16.mxu0 0
    %744 = vmatpush1.bf16.msra.mxu0 0
    %745 = vmatprep.subr.bf16.mxu0 0
    %746 = vmatpush1.bf16.msra.mxu0 0
    %747 = vmatprep.subr.bf16.mxu0 0
    %748 = vmatpush1.bf16.msra.mxu0 0
    %749 = vmatprep.subr.bf16.mxu0 0
    %750 = vmatpush1.bf16.msra.mxu0 0
    %751 = vmatprep.subr.bf16.mxu0 0
    %752 = vmatpush1.bf16.msra.mxu0 0
    %753 = vmatprep.subr.bf16.mxu0 0
    %754 = vmatpush1.bf16.msra.mxu0 0
    %755 = vmatprep.subr.bf16.mxu0 0
    %756 = vmatpush1.bf16.msra.mxu0 0
    %757 = vmatprep.subr.bf16.mxu0 0
    %758 = vmatpush1.bf16.msra.mxu0 0
    %759 = vmatprep.mubr.bf16.mxu0 0
    %760 = vmatmul.mubr.bf16.gmra.mrb[0].mxu0 %v711
    %v761 = vpop.f32.mrb[0].mxu0
    %v762 = vadd.f32 %v617, %v761
    %v763 = vpop.f32.mrb[0].mxu0
    %v764 = vpop.f32.mrb[0].mxu0
    %v765 = vadd.f32 %v621, %v764
    %v766 = vpop.f32.mrb[0].mxu0
    %767 = vmatprep.mubr.bf16.mxu0 0
    %768 = vmatmul.mubr.bf16.gmra.mrb[0].mxu0 %v712
    %v769 = vpop.f32.mrb[0].mxu0
    %v770 = vadd.f32 %v625, %v769
    %v771 = vpop.f32.mrb[0].mxu0
    %v772 = vpop.f32.mrb[0].mxu0
    %v773 = vadd.f32 %v629, %v772
    %v774 = vpop.f32.mrb[0].mxu0
    %775 = vmatprep.mubr.bf16.mxu0 0
    %776 = vmatmul.mubr.bf16.gmra.mrb[0].mxu0 %v713
    %v777 = vpop.f32.mrb[0].mxu0
    %v778 = vadd.f32 %v633, %v777
    %v779 = vpop.f32.mrb[0].mxu0
    %v780 = vpop.f32.mrb[0].mxu0
    %v781 = vadd.f32 %v637, %v780
    %v782 = vpop.f32.mrb[0].mxu0
    %783 = vmatprep.mubr.bf16.mxu0 0
    %784 = vmatmul.mubr.bf16.gmra.mrb[0].mxu0 %v714
    %v785 = vpop.f32.mrb[0].mxu0
    %v786 = vadd.f32 %v641, %v785
    %v787 = vpop.f32.mrb[0].mxu0
    %v788 = vpop.f32.mrb[0].mxu0
    %v789 = vadd.f32 %v645, %v788
    %v790 = vpop.f32.mrb[0].mxu0
    %791 = vmatprep.mubr.bf16.mxu0 0
    %792 = vmatmul.mubr.bf16.gmra.mrb[0].mxu0 %v715
    %v793 = vpop.f32.mrb[0].mxu0
    %v794 = vadd.f32 %v649, %v793
    %v795 = vpop.f32.mrb[0].mxu0
    %v796 = vpop.f32.mrb[0].mxu0
    %v797 = vadd.f32 %v653, %v796
    %v798 = vpop.f32.mrb[0].mxu0
    %799 = vmatprep.mubr.bf16.mxu0 0
    %800 = vmatmul.mubr.bf16.gmra.mrb[0].mxu0 %v716
    %v801 = vpop.f32.mrb[0].mxu0
    %v802 = vadd.f32 %v657, %v801
    %v803 = vpop.f32.mrb[0].mxu0
    %v804 = vpop.f32.mrb[0].mxu0
    %v805 = vadd.f32 %v661, %v804
    %v806 = vpop.f32.mrb[0].mxu0
    %807 = vmatprep.mubr.bf16.mxu0 0
    %808 = vmatmul.mubr.bf16.gmra.mrb[0].mxu0 %v717
    %v809 = vpop.f32.mrb[0].mxu0
    %v810 = vadd.f32 %v665, %v809
    %v811 = vpop.f32.mrb[0].mxu0
    %v812 = vpop.f32.mrb[0].mxu0
    %v813 = vadd.f32 %v669, %v812
    %v814 = vpop.f32.mrb[0].mxu0
    %815 = vmatprep.mubr.bf16.mxu0 0
    %816 = vmatmul.mubr.bf16.gmra.mrb[0].mxu0 %v718
    %v817 = vpop.f32.mrb[0].mxu0
    %v818 = vadd.f32 %v673, %v817
    %v819 = vpop.f32.mrb[0].mxu0
    %v820 = vpop.f32.mrb[0].mxu0
    %v821 = vadd.f32 %v677, %v820
    %v822 = vpop.f32.mrb[0].mxu0
    %823 = vdwg.mxu0
    %v824 = vmul.f32 %v762, 0.5
    %v825 = vmul.f32 %v765, 0.5
    %v826 = vmul.f32 %v770, 0.5
    %v827 = vmul.f32 %v773, 0.5
    %v828 = vmul.f32 %v778, 0.5
    %v829 = vmul.f32 %v781, 0.5
    %v830 = vmul.f32 %v786, 0.5
    %v831 = vmul.f32 %v789, 0.5
    %v832 = vmul.f32 %v794, 0.5
    %v833 = vmul.f32 %v797, 0.5
    %v834 = vmul.f32 %v802, 0.5
    %v835 = vmul.f32 %v805, 0.5
    %v836 = vmul.f32 %v810, 0.5
    %v837 = vmul.f32 %v813, 0.5
    %v838 = vmul.f32 %v818, 0.5
    %v839 = vmul.f32 %v821, 0.5
    %v840 = vtanh.pop %v824
    %v841 = vtanh.pop %v825
    %v842 = vtanh.pop %v826
    %v843 = vtanh.pop %v827
    %v844 = vtanh.pop %v828
    %v845 = vtanh.pop %v829
    %v846 = vtanh.pop %v830
    %v847 = vtanh.pop %v831
    %v848 = vtanh.pop %v832
    %v849 = vtanh.pop %v833
    %v850 = vtanh.pop %v834
    %v851 = vtanh.pop %v835
    %v852 = vtanh.pop %v836
    %v853 = vtanh.pop %v837
    %v854 = vtanh.pop %v838
    %v855 = vtanh.pop %v839
    %v856 = vmul.f32 %v840, 0.5
    %v857 = vmul.f32 %v841, 0.5
    %v858 = vmul.f32 %v842, 0.5
    %v859 = vmul.f32 %v843, 0.5
    %v860 = vmul.f32 %v844, 0.5
    %v861 = vmul.f32 %v845, 0.5
    %v862 = vmul.f32 %v846, 0.5
    %v863 = vmul.f32 %v847, 0.5
    %v864 = vmul.f32 %v848, 0.5
    %v865 = vmul.f32 %v849, 0.5
    %v866 = vmul.f32 %v850, 0.5
    %v867 = vmul.f32 %v851, 0.5
    %v868 = vmul.f32 %v852, 0.5
    %v869 = vmul.f32 %v853, 0.5
    %v870 = vmul.f32 %v854, 0.5
    %v871 = vmul.f32 %v855, 0.5
    %v872 = vadd.f32 %v856, 0.5
    %v873 = vadd.f32 %v857, 0.5
    %v874 = vadd.f32 %v858, 0.5
    %v875 = vadd.f32 %v859, 0.5
    %v876 = vadd.f32 %v860, 0.5
    %v877 = vadd.f32 %v861, 0.5
    %v878 = vadd.f32 %v862, 0.5
    %v879 = vadd.f32 %v863, 0.5
    %v880 = vadd.f32 %v864, 0.5
    %v881 = vadd.f32 %v865, 0.5
    %v882 = vadd.f32 %v866, 0.5
    %v883 = vadd.f32 %v867, 0.5
    %v884 = vadd.f32 %v868, 0.5
    %v885 = vadd.f32 %v869, 0.5
    %v886 = vadd.f32 %v870, 0.5
    %v887 = vadd.f32 %v871, 0.5
    %s888 = scalar_lea.vmem [#allocation2], 128
    %v889 = vld [vmem:[%s888] sm:$0xf]
    %v890 = vld [vmem:[%s888 + $0x4] sm:$0xf]
    %v891 = vld [vmem:[%s888 + $0x8] sm:$0xf]
    %v892 = vld [vmem:[%s888 + $0xc] sm:$0xf]
    %v893 = vld [vmem:[%s888 + $0x10] sm:$0xf]
    %v894 = vld [vmem:[%s888 + $0x14] sm:$0xf]
    %v895 = vld [vmem:[%s888 + $0x18] sm:$0xf]
    %v896 = vld [vmem:[%s888 + $0x1c] sm:$0xf]
    %v897 = vld [vmem:[%s888 + $0x20] sm:$0xf]
    %v898 = vld [vmem:[%s888 + $0x24] sm:$0xf]
    %v899 = vld [vmem:[%s888 + $0x28] sm:$0xf]
    %v900 = vld [vmem:[%s888 + $0x2c] sm:$0xf]
    %v901 = vld [vmem:[%s888 + $0x30] sm:$0xf]
    %v902 = vld [vmem:[%s888 + $0x34] sm:$0xf]
    %v903 = vld [vmem:[%s888 + $0x38] sm:$0xf]
    %v904 = vld [vmem:[%s888 + $0x3c] sm:$0xf]
    %v905 = vpack.c.bf16 %v873, %v872
    %v906 = vpack.c.bf16 %v875, %v874
    %v907 = vpack.c.bf16 %v877, %v876
    %v908 = vpack.c.bf16 %v879, %v878
    %v909 = vpack.c.bf16 %v881, %v880
    %v910 = vpack.c.bf16 %v883, %v882
    %v911 = vpack.c.bf16 %v885, %v884
    %v912 = vpack.c.bf16 %v887, %v886
    %913 = vset.pattern.permute.xlu0 4
    %914 = vperm.xlu0 %913, %v31
    %v915 = vpop.permute.xlu0 %914
    %917 = vset.pattern.permute.xlu0 4
    %918 = vperm.xlu0 %917, %v32
    %v919 = vpop.permute.xlu0 %918
    %921 = vset.pattern.permute.xlu0 4
    %922 = vperm.xlu0 %921, %v33
    %v923 = vpop.permute.xlu0 %922
    %925 = vset.pattern.permute.xlu0 4
    %926 = vperm.xlu0 %925, %v34
    %v927 = vpop.permute.xlu0 %926
    %929 = vset.pattern.permute.xlu0 4
    %930 = vperm.xlu0 %929, %v35
    %v931 = vpop.permute.xlu0 %930
    %933 = vset.pattern.permute.xlu0 4
    %934 = vperm.xlu0 %933, %v36
    %v935 = vpop.permute.xlu0 %934
    %937 = vset.pattern.permute.xlu0 4
    %938 = vperm.xlu0 %937, %v37
    %v939 = vpop.permute.xlu0 %938
    %941 = vset.pattern.permute.xlu0 4
    %942 = vperm.xlu0 %941, %v38
    %v943 = vpop.permute.xlu0 %942
    %945 = vset.pattern.permute.xlu0 4
    %946 = vperm.xlu0 %945, %v39
    %v947 = vpop.permute.xlu0 %946
    %949 = vset.pattern.permute.xlu0 4
    %950 = vperm.xlu0 %949, %v40
    %v951 = vpop.permute.xlu0 %950
    %953 = vset.pattern.permute.xlu0 4
    %954 = vperm.xlu0 %953, %v41
    %v955 = vpop.permute.xlu0 %954
    %957 = vset.pattern.permute.xlu0 4
    %958 = vperm.xlu0 %957, %v42
    %v959 = vpop.permute.xlu0 %958
    %961 = vset.pattern.permute.xlu0 4
    %962 = vperm.xlu0 %961, %v43
    %v963 = vpop.permute.xlu0 %962
    %965 = vset.pattern.permute.xlu0 4
    %966 = vperm.xlu0 %965, %v44
    %v967 = vpop.permute.xlu0 %966
    %969 = vset.pattern.permute.xlu0 4
    %970 = vperm.xlu0 %969, %v45
    %v971 = vpop.permute.xlu0 %970
    %973 = vset.pattern.permute.xlu0 4
    %974 = vperm.xlu0 %973, %v46
    %v975 = vpop.permute.xlu0 %974
    %v993 = vunpack.c.l.b16 %v889
    %v994 = vunpack.c.l.b16 %v890
    %v995 = vunpack.c.l.b16 %v891
    %v996 = vunpack.c.l.b16 %v892
    %v997 = vunpack.c.l.b16 %v893
    %v998 = vunpack.c.l.b16 %v894
    %v999 = vunpack.c.l.b16 %v895
    %v1000 = vunpack.c.l.b16 %v896
    %v1001 = vunpack.c.l.b16 %v897
    %v1002 = vunpack.c.l.b16 %v898
    %v1003 = vunpack.c.l.b16 %v899
    %v1004 = vunpack.c.l.b16 %v900
    %v1005 = vunpack.c.l.b16 %v901
    %v1006 = vunpack.c.l.b16 %v902
    %v1007 = vunpack.c.l.b16 %v903
    %v1008 = vunpack.c.l.b16 %v904
    %v1009 = vpack.c.b16 %v994, %v993
    %v1010 = vpack.c.b16 %v996, %v995
    %v1011 = vpack.c.b16 %v998, %v997
    %v1012 = vpack.c.b16 %v1000, %v999
    %v1013 = vpack.c.b16 %v1002, %v1001
    %v1014 = vpack.c.b16 %v1004, %v1003
    %v1015 = vpack.c.b16 %v1006, %v1005
    %v1016 = vpack.c.b16 %v1008, %v1007
    %1025 = vmatprep.subr.bf16.mxu0 0
    %1026 = vmatpush1.bf16.msra.mxu0 %v905
    %1027 = vmatprep.subr.bf16.mxu0 0
    %1028 = vmatpush1.bf16.msra.mxu0 %v906
    %1029 = vmatprep.subr.bf16.mxu0 0
    %1030 = vmatpush1.bf16.msra.mxu0 %v907
    %1031 = vmatprep.subr.bf16.mxu0 0
    %1032 = vmatpush1.bf16.msra.mxu0 %v908
    %1033 = vmatprep.subr.bf16.mxu0 0
    %1034 = vmatpush1.bf16.msra.mxu0 %v909
    %1035 = vmatprep.subr.bf16.mxu0 0
    %1036 = vmatpush1.bf16.msra.mxu0 %v910
    %1037 = vmatprep.subr.bf16.mxu0 0
    %1038 = vmatpush1.bf16.msra.mxu0 %v911
    %1039 = vmatprep.subr.bf16.mxu0 0
    %1040 = vmatpush1.bf16.msra.mxu0 %v912
    %1041 = vmatprep.subr.bf16.mxu0 0
    %1042 = vmatpush1.bf16.msra.mxu0 0
    %1043 = vmatprep.subr.bf16.mxu0 0
    %1044 = vmatpush1.bf16.msra.mxu0 0
    %1045 = vmatprep.subr.bf16.mxu0 0
    %1046 = vmatpush1.bf16.msra.mxu0 0
    %1047 = vmatprep.subr.bf16.mxu0 0
    %1048 = vmatpush1.bf16.msra.mxu0 0
    %1049 = vmatprep.subr.bf16.mxu0 0
    %1050 = vmatpush1.bf16.msra.mxu0 0
    %1051 = vmatprep.subr.bf16.mxu0 0
    %1052 = vmatpush1.bf16.msra.mxu0 0
    %1053 = vmatprep.subr.bf16.mxu0 0
    %1054 = vmatpush1.bf16.msra.mxu0 0
    %1055 = vmatprep.subr.bf16.mxu0 0
    %1056 = vmatpush1.bf16.msra.mxu0 0
    %1057 = vmatprep.mubr.bf16.mxu0 0
    %1058 = vmatmul.mubr.bf16.gmra.mrb[0].mxu0 %v1009
    %v1059 = vpop.f32.mrb[0].mxu0
    %v1060 = vadd.f32 %v915, %v1059
    %v1061 = vpop.f32.mrb[0].mxu0
    %v1062 = vpop.f32.mrb[0].mxu0
    %v1063 = vadd.f32 %v919, %v1062
    %v1064 = vpop.f32.mrb[0].mxu0
    %1065 = vmatprep.mubr.bf16.mxu0 0
    %1066 = vmatmul.mubr.bf16.gmra.mrb[0].mxu0 %v1010
    %v1067 = vpop.f32.mrb[0].mxu0
    %v1068 = vadd.f32 %v923, %v1067
    %v1069 = vpop.f32.mrb[0].mxu0
    %v1070 = vpop.f32.mrb[0].mxu0
    %v1071 = vadd.f32 %v927, %v1070
    %v1072 = vpop.f32.mrb[0].mxu0
    %1073 = vmatprep.mubr.bf16.mxu0 0
    %1074 = vmatmul.mubr.bf16.gmra.mrb[0].mxu0 %v1011
    %v1075 = vpop.f32.mrb[0].mxu0
    %v1076 = vadd.f32 %v931, %v1075
    %v1077 = vpop.f32.mrb[0].mxu0
    %v1078 = vpop.f32.mrb[0].mxu0
    %v1079 = vadd.f32 %v935, %v1078
    %v1080 = vpop.f32.mrb[0].mxu0
    %1081 = vmatprep.mubr.bf16.mxu0 0
    %1082 = vmatmul.mubr.bf16.gmra.mrb[0].mxu0 %v1012
    %v1083 = vpop.f32.mrb[0].mxu0
    %v1084 = vadd.f32 %v939, %v1083
    %v1085 = vpop.f32.mrb[0].mxu0
    %v1086 = vpop.f32.mrb[0].mxu0
    %v1087 = vadd.f32 %v943, %v1086
    %v1088 = vpop.f32.mrb[0].mxu0
    %1089 = vmatprep.mubr.bf16.mxu0 0
    %1090 = vmatmul.mubr.bf16.gmra.mrb[0].mxu0 %v1013
    %v1091 = vpop.f32.mrb[0].mxu0
    %v1092 = vadd.f32 %v947, %v1091
    %v1093 = vpop.f32.mrb[0].mxu0
    %v1094 = vpop.f32.mrb[0].mxu0
    %v1095 = vadd.f32 %v951, %v1094
    %v1096 = vpop.f32.mrb[0].mxu0
    %1097 = vmatprep.mubr.bf16.mxu0 0
    %1098 = vmatmul.mubr.bf16.gmra.mrb[0].mxu0 %v1014
    %v1099 = vpop.f32.mrb[0].mxu0
    %v1100 = vadd.f32 %v955, %v1099
    %v1101 = vpop.f32.mrb[0].mxu0
    %v1102 = vpop.f32.mrb[0].mxu0
    %v1103 = vadd.f32 %v959, %v1102
    %v1104 = vpop.f32.mrb[0].mxu0
    %1105 = vmatprep.mubr.bf16.mxu0 0
    %1106 = vmatmul.mubr.bf16.gmra.mrb[0].mxu0 %v1015
    %v1107 = vpop.f32.mrb[0].mxu0
    %v1108 = vadd.f32 %v963, %v1107
    %v1109 = vpop.f32.mrb[0].mxu0
    %v1110 = vpop.f32.mrb[0].mxu0
    %v1111 = vadd.f32 %v967, %v1110
    %v1112 = vpop.f32.mrb[0].mxu0
    %1113 = vmatprep.mubr.bf16.mxu0 0
    %1114 = vmatmul.mubr.bf16.gmra.mrb[0].mxu0 %v1016
    %v1115 = vpop.f32.mrb[0].mxu0
    %v1116 = vadd.f32 %v971, %v1115
    %v1117 = vpop.f32.mrb[0].mxu0
    %v1118 = vpop.f32.mrb[0].mxu0
    %v1119 = vadd.f32 %v975, %v1118
    %v1120 = vpop.f32.mrb[0].mxu0
    %1121 = vdwg.mxu0
    %v1122 = vmul.f32 %v1060, 0.5
    %v1123 = vmul.f32 %v1063, 0.5
    %v1124 = vmul.f32 %v1068, 0.5
    %v1125 = vmul.f32 %v1071, 0.5
    %v1126 = vmul.f32 %v1076, 0.5
    %v1127 = vmul.f32 %v1079, 0.5
    %v1128 = vmul.f32 %v1084, 0.5
    %v1129 = vmul.f32 %v1087, 0.5
    %v1130 = vmul.f32 %v1092, 0.5
    %v1131 = vmul.f32 %v1095, 0.5
    %v1132 = vmul.f32 %v1100, 0.5
    %v1133 = vmul.f32 %v1103, 0.5
    %v1134 = vmul.f32 %v1108, 0.5
    %v1135 = vmul.f32 %v1111, 0.5
    %v1136 = vmul.f32 %v1116, 0.5
    %v1137 = vmul.f32 %v1119, 0.5
    %v1138 = vtanh.pop %v1122
    %v1139 = vtanh.pop %v1123
    %v1140 = vtanh.pop %v1124
    %v1141 = vtanh.pop %v1125
    %v1142 = vtanh.pop %v1126
    %v1143 = vtanh.pop %v1127
    %v1144 = vtanh.pop %v1128
    %v1145 = vtanh.pop %v1129
    %v1146 = vtanh.pop %v1130
    %v1147 = vtanh.pop %v1131
    %v1148 = vtanh.pop %v1132
    %v1149 = vtanh.pop %v1133
    %v1150 = vtanh.pop %v1134
    %v1151 = vtanh.pop %v1135
    %v1152 = vtanh.pop %v1136
    %v1153 = vtanh.pop %v1137
    %v1154 = vmul.f32 %v1138, 0.5
    %v1155 = vmul.f32 %v1139, 0.5
    %v1156 = vmul.f32 %v1140, 0.5
    %v1157 = vmul.f32 %v1141, 0.5
    %v1158 = vmul.f32 %v1142, 0.5
    %v1159 = vmul.f32 %v1143, 0.5
    %v1160 = vmul.f32 %v1144, 0.5
    %v1161 = vmul.f32 %v1145, 0.5
    %v1162 = vmul.f32 %v1146, 0.5
    %v1163 = vmul.f32 %v1147, 0.5
    %v1164 = vmul.f32 %v1148, 0.5
    %v1165 = vmul.f32 %v1149, 0.5
    %v1166 = vmul.f32 %v1150, 0.5
    %v1167 = vmul.f32 %v1151, 0.5
    %v1168 = vmul.f32 %v1152, 0.5
    %v1169 = vmul.f32 %v1153, 0.5
    %v1170 = vadd.f32 %v1154, 0.5
    %v1171 = vadd.f32 %v1155, 0.5
    %v1172 = vadd.f32 %v1156, 0.5
    %v1173 = vadd.f32 %v1157, 0.5
    %v1174 = vadd.f32 %v1158, 0.5
    %v1175 = vadd.f32 %v1159, 0.5
    %v1176 = vadd.f32 %v1160, 0.5
    %v1177 = vadd.f32 %v1161, 0.5
    %v1178 = vadd.f32 %v1162, 0.5
    %v1179 = vadd.f32 %v1163, 0.5
    %v1180 = vadd.f32 %v1164, 0.5
    %v1181 = vadd.f32 %v1165, 0.5
    %v1182 = vadd.f32 %v1166, 0.5
    %v1183 = vadd.f32 %v1167, 0.5
    %v1184 = vadd.f32 %v1168, 0.5
    %v1185 = vadd.f32 %v1169, 0.5
    %v1186 = vld [vmem:[%s2] sm:$0x1]
    %1187 = vset.pattern.permute.xlu0 5
    %1188 = vperm.xlu0 %1187, %v31
    %v1189 = vpop.permute.xlu0 %1188
    %1191 = vset.pattern.permute.xlu0 5
    %1192 = vperm.xlu0 %1191, %v32
    %v1193 = vpop.permute.xlu0 %1192
    %1195 = vset.pattern.permute.xlu0 5
    %1196 = vperm.xlu0 %1195, %v33
    %v1197 = vpop.permute.xlu0 %1196
    %1199 = vset.pattern.permute.xlu0 5
    %1200 = vperm.xlu0 %1199, %v34
    %v1201 = vpop.permute.xlu0 %1200
    %1203 = vset.pattern.permute.xlu0 5
    %1204 = vperm.xlu0 %1203, %v35
    %v1205 = vpop.permute.xlu0 %1204
    %1207 = vset.pattern.permute.xlu0 5
    %1208 = vperm.xlu0 %1207, %v36
    %v1209 = vpop.permute.xlu0 %1208
    %1211 = vset.pattern.permute.xlu0 5
    %1212 = vperm.xlu0 %1211, %v37
    %v1213 = vpop.permute.xlu0 %1212
    %1215 = vset.pattern.permute.xlu0 5
    %1216 = vperm.xlu0 %1215, %v38
    %v1217 = vpop.permute.xlu0 %1216
    %1219 = vset.pattern.permute.xlu0 5
    %1220 = vperm.xlu0 %1219, %v39
    %v1221 = vpop.permute.xlu0 %1220
    %1223 = vset.pattern.permute.xlu0 5
    %1224 = vperm.xlu0 %1223, %v40
    %v1225 = vpop.permute.xlu0 %1224
    %1227 = vset.pattern.permute.xlu0 5
    %1228 = vperm.xlu0 %1227, %v41
    %v1229 = vpop.permute.xlu0 %1228
    %1231 = vset.pattern.permute.xlu0 5
    %1232 = vperm.xlu0 %1231, %v42
    %v1233 = vpop.permute.xlu0 %1232
    %1235 = vset.pattern.permute.xlu0 5
    %1236 = vperm.xlu0 %1235, %v43
    %v1237 = vpop.permute.xlu0 %1236
    %1239 = vset.pattern.permute.xlu0 5
    %1240 = vperm.xlu0 %1239, %v44
    %v1241 = vpop.permute.xlu0 %1240
    %1243 = vset.pattern.permute.xlu0 5
    %1244 = vperm.xlu0 %1243, %v45
    %v1245 = vpop.permute.xlu0 %1244
    %1247 = vset.pattern.permute.xlu0 5
    %1248 = vperm.xlu0 %1247, %v46
    %v1249 = vpop.permute.xlu0 %1248
    %v1251 = vmul.f32 %v1170, %v1189
    %v1252 = vmul.f32 %v1171, %v1193
    %v1253 = vmul.f32 %v1172, %v1197
    %v1254 = vmul.f32 %v1173, %v1201
    %v1255 = vmul.f32 %v1174, %v1205
    %v1256 = vmul.f32 %v1175, %v1209
    %v1257 = vmul.f32 %v1176, %v1213
    %v1258 = vmul.f32 %v1177, %v1217
    %v1259 = vmul.f32 %v1178, %v1221
    %v1260 = vmul.f32 %v1179, %v1225
    %v1261 = vmul.f32 %v1180, %v1229
    %v1262 = vmul.f32 %v1181, %v1233
    %v1263 = vmul.f32 %v1182, %v1237
    %v1264 = vmul.f32 %v1183, %v1241
    %v1265 = vmul.f32 %v1184, %v1245
    %v1266 = vmul.f32 %v1185, %v1249
    %v1267 = vadd.f32 %v1251, %v1252
    %v1268 = vadd.f32 %v1267, %v1253
    %v1269 = vadd.f32 %v1268, %v1254
    %v1270 = vadd.f32 %v1269, %v1255
    %v1271 = vadd.f32 %v1270, %v1256
    %v1272 = vadd.f32 %v1271, %v1257
    %v1273 = vadd.f32 %v1272, %v1258
    %v1274 = vadd.f32 %v1273, %v1259
    %v1275 = vadd.f32 %v1274, %v1260
    %v1276 = vadd.f32 %v1275, %v1261
    %v1277 = vadd.f32 %v1276, %v1262
    %v1278 = vadd.f32 %v1277, %v1263
    %v1279 = vadd.f32 %v1278, %v1264
    %v1280 = vadd.f32 %v1279, %v1265
    %v1281 = vadd.f32 %v1280, %v1266
    %v1282 = vrot.slane %v1281, 4
    %v1283 = vadd.f32 %v1281, %v1282
    %v1284 = vrot.slane %v1283, 2
    %v1285 = vadd.f32 %v1283, %v1284
    %v1286 = vrot.slane %v1285, 1
    %v1287 = vadd.f32 %v1285, %v1286
    %1289 = vset.pattern.permute.xlu0 6
    %1290 = vperm.xlu0 %1289, %v1186
    %v1291 = vpop.permute.xlu0 %1290
    %v1293 = vadd.f32 %v1287, %v1291
    %v1294 = vmul.f32 %v1293, 0.5
    %v1295 = vtanh.pop %v1294
    %v1296 = vmul.f32 %v1295, 0.5
    %v1297 = vadd.f32 %v1296, 0.5
    %1298 = vst [vmem:[#allocation5] sm:$0x1] %v1297
    // Predicated region
    $region18: #{tpu_custom_call.1} parent=1 // pred_check
      _
    $region19: #{tpu_custom_call.1} parent=1 // pred_check_branch
      %1300 = sbr.rel (0) target = $region21
    $region20: #{tpu_custom_call.1} parent=1 // pred_region
      %s1302 = ssub.s32 16, 16
      %1303 = vsyncadd [#allocation4], %s1302
      %s1305 = sshll.u32 [#allocation5], 4
      %s1306 = int_to_ptr.vmem [resolvable:$true] %s1305
      %1308 = dma.vmem_to_hbm [thread:$0]  %s1306, 16, %s3, [#allocation4]
    $region21: #{tpu_custom_call.1} parent=1 // pred_fallthru
      _
    // Predicated region
    $region22: #{tpu_custom_call.1} parent=1 // pred_check
      _
    $region23: #{tpu_custom_call.1} parent=1 // pred_check_branch
      %1310 = sbr.rel (0) target = $region25
    $region24: #{tpu_custom_call.1} parent=1 // pred_region
      %1311 = dma.done [#allocation4], 16
    $region25: #{tpu_custom_call.1} parent=1 // pred_fallthru
      _
    %1312 = vsyncpa [#allocation3], 1
    %1313 = vsyncpa [#allocation4], 1

</llo_original>
